<compile_context>
chip_gen: v6e
topology: v6e:2x2x1
jax: 0.10.0
libtpu: 0.0.40
codegen_flags: <defaults>
</compile_context>

<pallas_src>
import functools

import jax
import jax.numpy as jnp
from jax.experimental import pallas as pl
from jax.experimental.pallas import tpu as pltpu


def _round_up(x, m):
    return ((x + m - 1) // m) * m


def _vmem_capacity_bytes():
    try:
        cap = getattr(pltpu.get_tpu_info(), "vmem_capacity_bytes", None)
        if cap:
            return int(cap)
    except Exception:
        pass
    return 64 << 20  # conservative fallback (v7x per-core VMEM)


def _derive_block_rows(d, in_itemsize, out_itemsize):
    """Largest row tile (<=512) whose footprint fits comfortably in this chip's VMEM."""
    budget = int(_vmem_capacity_bytes() * 0.55)        # headroom for Mosaic internal scratch
    weights = 16 * d * d + 32 * d                      # bf16 W_top/W_bot (single-buffered) + LN params
    per_row = (4 * d * in_itemsize                     # h_g + h_c, double-buffered
               + 4 * d * out_itemsize                  # (tm, 2d) output, double-buffered
               + 44 * d)                               # in-kernel f32/bf16 intermediates
    rows = (budget - weights) // max(per_row, 1)
    rows = max(64, min(int(rows), 512))
    return rows - rows % 8


def _pick_block_rows(n8, target):
    """Row tile: multiple of 8, prefer a divisor of n8 (zero pad waste), keep >= 2 grid steps."""
    target = max(8, min(target, n8))
    if n8 >= 16:
        # Guarantee >= 2 grid steps so the 'parallel' axis can shard across v7x's 2 TensorCores.
        target = min(target, _round_up(n8 // 2, 8))
    target -= target % 8
    target = max(target, 8)
    floor = max(8, (target // 4) - (target // 4) % 8)
    for br in range(target, floor - 1, -8):
        if n8 % br == 0:
            return br
    return target


def _vmem_limit_bytes(block_rows, d, in_itemsize, out_itemsize):
    need = (4 * block_rows * d * in_itemsize           # double-buffered inputs
            + 4 * block_rows * d * out_itemsize        # double-buffered output
            + 16 * d * d + 32 * d                      # resident weights + LN params
            + 44 * block_rows * d)                     # internal temps
    limit = int(need * 1.4) + (8 << 20)
    limit = min(limit, int(_vmem_capacity_bytes() * 0.92))
    return max(limit, 32 << 20)


def _gated_fuse_kernel(hg_ref, hc_ref, wt_ref, wb_ref, p_ref, o_ref, *, eps, split_glu):
    hg = hg_ref[...].astype(jnp.float32)               # (tm, d)
    hc = hc_ref[...].astype(jnp.float32)               # (tm, d)
    d = hg.shape[-1]
    two_d = 2 * d

    # ---- LayerNorm 1 over the (virtual) concat [h_g, h_c]: stats across both halves, f32 ----
    mu = (jnp.sum(hg, -1, keepdims=True) + jnp.sum(hc, -1, keepdims=True)) * (1.0 / two_d)
    hgc = hg - mu
    hcc = hc - mu
    var = (jnp.sum(hgc * hgc, -1, keepdims=True)
           + jnp.sum(hcc * hcc, -1, keepdims=True)) * (1.0 / two_d)
    inv = jax.lax.rsqrt(var + eps)

    g1 = p_ref[0:1, :]                                 # (1, 2d) f32
    b1 = p_ref[1:2, :]
    g2 = p_ref[2:3, :]
    b2 = p_ref[3:4, :]

    # Per-half LN1 affine, cast to bf16 MXU operands. No concat, no (tm,2d) f32 temp.
    xng = (hgc * inv * g1[:, :d] + b1[:, :d]).astype(jnp.bfloat16)
    xnc = (hcc * inv * g1[:, d:] + b1[:, d:]).astype(jnp.bfloat16)

    # ---- Linear (2d -> 4d, no bias) on the MXU, f32 accumulation ----
    if split_glu:
        # 2d is a multiple of 128: lane-aligned weight-column slices, write c/g directly.
        c = (jnp.dot(xng, wt_ref[:, :two_d], preferred_element_type=jnp.float32)
             + jnp.dot(xnc, wb_ref[:, :two_d], preferred_element_type=jnp.float32))
        g = (jnp.dot(xng, wt_ref[:, two_d:], preferred_element_type=jnp.float32)
             + jnp.dot(xnc, wb_ref[:, two_d:], preferred_element_type=jnp.float32))
    else:
        # Tiny d: one wide (tm, 4d) pass fills the MXU output tile better; slice c/g after.
        y = (jnp.dot(xng, wt_ref[...], preferred_element_type=jnp.float32)
             + jnp.dot(xnc, wb_ref[...], preferred_element_type=jnp.float32))
        c = y[:, :two_d]
        g = y[:, two_d:]

    # ---- GLU: value * sigmoid(gate). Dropout(0.1) is identity in eval mode. ----
    z = c * jax.nn.sigmoid(g)
    # TODO(synk): training-mode dropout via pltpu.prng_seed / pltpu.prng_random_bits + jnp.where.

    # ---- LayerNorm 2 over last dim (2d) ----
    mu2 = jnp.mean(z, -1, keepdims=True)
    zc = z - mu2
    var2 = jnp.mean(zc * zc, -1, keepdims=True)
    out = zc * jax.lax.rsqrt(var2 + eps) * g2 + b2

    o_ref[...] = out.astype(o_ref.dtype)


def prepare_gated_fuse_params(w, gamma1, beta1, gamma2, beta2):
    """One-time parameter prep (call at parameter-load time, NOT per forward call)."""
    two_d, four_d = w.shape
    d = two_d // 2
    assert four_d == 4 * d
    w_top = jnp.asarray(w[:d, :], dtype=jnp.bfloat16)    # (d, 4d): rows multiplying the h_g half
    w_bot = jnp.asarray(w[d:, :], dtype=jnp.bfloat16)    # (d, 4d): rows multiplying the h_c half
    params = jnp.stack(
        [gamma1.ravel(), beta1.ravel(), gamma2.ravel(), beta2.ravel()], axis=0
    ).astype(jnp.float32)                                # (4, 2d) packed LN params
    return w_top, w_bot, params


def gated_fuse(h_g, h_c, w_top, w_bot, params, *, eps=1e-5,
               block_rows=None, vmem_limit_bytes=None):
    """Fused GatedFuse forward. h_g, h_c: (..., d). Returns (..., 2d) in the input dtype."""
    d = h_g.shape[-1]
    two_d, four_d = 2 * d, 4 * d
    assert h_c.shape == h_g.shape
    assert w_top.shape == (d, four_d) and w_bot.shape == (d, four_d)
    assert params.shape == (4, two_d)
    # TODO(synk): for very large d (resident bf16 weights = 16*d^2 bytes approaching VMEM),
    # add a K-reduction grid axis streaming (tk, 4d) weight slabs into a VMEM accumulator.

    lead = h_g.shape[:-1]
    hg2 = h_g.reshape(-1, d)
    hc2 = h_c.reshape(-1, d)
    n = hg2.shape[0]
    n8 = _round_up(n, 8)

    in_isz = jnp.dtype(h_g.dtype).itemsize
    out_isz = in_isz
    if block_rows is None:
        block_rows = _derive_block_rows(d, in_isz, out_isz)
    block_rows = _pick_block_rows(n8, block_rows)
    grid_m = -(-n8 // block_rows)
    n_pad = grid_m * block_rows
    if n_pad != n:
        pad = n_pad - n
        hg2 = jnp.pad(hg2, ((0, pad), (0, 0)))
        hc2 = jnp.pad(hc2, ((0, pad), (0, 0)))

    split_glu = (two_d % 128 == 0)
    kernel = functools.partial(_gated_fuse_kernel, eps=eps, split_glu=split_glu)

    limit = vmem_limit_bytes if vmem_limit_bytes is not None else _vmem_limit_bytes(
        block_rows, d, in_isz, out_isz)

    resident = pl.Buffered(1)   # constant index_map -> single buffer, no 2x VMEM waste
    cost = pl.CostEstimate(
        flops=2 * n_pad * two_d * four_d,
        transcendentals=n_pad * two_d,                               # sigmoid
        bytes_accessed=(2 * n * d * in_isz + n * two_d * out_isz
                        + 2 * d * four_d * 2 + 4 * two_d * 4),
    )

    out = pl.pallas_call(
        kernel,
        out_shape=jax.ShapeDtypeStruct((n_pad, two_d), h_g.dtype),
        grid_spec=pltpu.PrefetchScalarGridSpec(
            num_scalar_prefetch=0,
            grid=(grid_m,),
            in_specs=[
                pl.BlockSpec((block_rows, d), lambda i: (i, 0)),                        # h_g rows
                pl.BlockSpec((block_rows, d), lambda i: (i, 0)),                        # h_c rows
                pl.BlockSpec((d, four_d), lambda i: (0, 0), pipeline_mode=resident),    # W_top bf16
                pl.BlockSpec((d, four_d), lambda i: (0, 0), pipeline_mode=resident),    # W_bot bf16
                pl.BlockSpec((4, two_d), lambda i: (0, 0), pipeline_mode=resident),     # LN params
            ],
            out_specs=pl.BlockSpec((block_rows, two_d), lambda i: (i, 0)),
        ),
        compiler_params=pltpu.CompilerParams(
            dimension_semantics=("parallel",),
            vmem_limit_bytes=limit,
        ),
        cost_estimate=cost,
    )(hg2, hc2, w_top, w_bot, params)

    if n_pad != n:
        out = out[:n]
    return out.reshape(*lead, two_d)


def gated_fuse_reference(h_g, h_c, w, gamma1, beta1, gamma2, beta2, eps=1e-5):
    x = jnp.concatenate([h_g, h_c], axis=-1).astype(jnp.float32)
    mu = jnp.mean(x, -1, keepdims=True)
    var = jnp.mean((x - mu) ** 2, -1, keepdims=True)
    xn = (x - mu) / jnp.sqrt(var + eps) * gamma1 + beta1
    y = xn @ w
    d2 = x.shape[-1]
    c, g = y[..., :d2], y[..., d2:]
    z = c * jax.nn.sigmoid(g)
    mu2 = jnp.mean(z, -1, keepdims=True)
    var2 = jnp.mean((z - mu2) ** 2, -1, keepdims=True)
    return (z - mu2) / jnp.sqrt(var2 + eps) * gamma2 + beta2


if __name__ == "__main__":
    key = jax.random.PRNGKey(0)
    B, S, d = 2, 8, 32                     # batch=2, seq=8, hidden d=32 -> 2d=64, 4d=128
    k1, k2, k3 = jax.random.split(key, 3)

    h_g = jax.random.normal(k1, (B, S, d), dtype=jnp.float32)
    h_c = jax.random.normal(k2, (B, S, d), dtype=jnp.float32)

    # Deterministic parameter init (synthetic; matches nn.Linear / nn.LayerNorm shapes).
    w = jax.random.normal(k3, (2 * d, 4 * d), dtype=jnp.float32) * (1.0 / jnp.sqrt(2.0 * d))
    gamma1 = jnp.ones((2 * d,), jnp.float32)
    beta1 = jnp.zeros((2 * d,), jnp.float32)
    gamma2 = jnp.ones((2 * d,), jnp.float32)
    beta2 = jnp.zeros((2 * d,), jnp.float32)

    # One-time prep (hoisted out of the per-call path).
    w_top, w_bot, ln_params = prepare_gated_fuse_params(w, gamma1, beta1, gamma2, beta2)

    out = gated_fuse(h_g, h_c, w_top, w_bot, ln_params)
    out = jax.block_until_ready(out)

    ref = gated_fuse_reference(h_g, h_c, w, gamma1, beta1, gamma2, beta2)
    assert out.shape == (B, S, 2 * d)
    # Tolerance accounts for bf16 MXU operands (f32 accumulation) inside the kernel.
    assert jnp.allclose(out, ref, atol=3e-2, rtol=3e-2), "mismatch vs reference"

    print("KERNEL_OK")
</pallas_src>

<mosaic_0001>
module attributes {stable_mosaic.version = 11 : i64} {
  func.func @_gated_fuse_kernel(%arg0: i32, %arg1: memref<8x32xf32, #tpu.memory_space<vmem>>, %arg2: memref<8x32xf32, #tpu.memory_space<vmem>>, %arg3: memref<32x128xbf16, #tpu.memory_space<vmem>>, %arg4: memref<32x128xbf16, #tpu.memory_space<vmem>>, %arg5: memref<4x64xf32, #tpu.memory_space<vmem>>, %arg6: memref<8x64xf32, #tpu.memory_space<vmem>>) attributes {dimension_semantics = [#tpu.dimension_semantics<parallel>], iteration_bounds = array<i64: 2>, scalar_prefetch = 0 : i64, scratch_operands = 0 : i64, tpu.core_type = #tpu.core_type<tc>, window_params = [{transform_indices = @transform_0, window_bounds = array<i64: 8, 32>}, {transform_indices = @transform_1, window_bounds = array<i64: 8, 32>}, {pipeline_mode = #tpu.pipeline_mode<synchronous>, transform_indices = @transform_2, window_bounds = array<i64: 32, 128>}, {pipeline_mode = #tpu.pipeline_mode<synchronous>, transform_indices = @transform_3, window_bounds = array<i64: 32, 128>}, {pipeline_mode = #tpu.pipeline_mode<synchronous>, transform_indices = @transform_4, window_bounds = array<i64: 4, 64>}, {transform_indices = @transform_5, window_bounds = array<i64: 8, 64>}]} {
    %c0 = arith.constant 0 : index
    %c0_0 = arith.constant 0 : index
    %0 = vector.load %arg1[%c0, %c0_0] : memref<8x32xf32, #tpu.memory_space<vmem>>, vector<8x32xf32>
    %c0_1 = arith.constant 0 : index
    %c0_2 = arith.constant 0 : index
    %1 = vector.load %arg2[%c0_1, %c0_2] : memref<8x32xf32, #tpu.memory_space<vmem>>, vector<8x32xf32>
    %cst = arith.constant dense<0.000000e+00> : vector<8xf32>
    %2 = vector.multi_reduction <add>, %0, %cst [1] : vector<8x32xf32> to vector<8xf32>
    %3 = vector.shape_cast %2 : vector<8xf32> to vector<8x1xf32>
    %cst_3 = arith.constant dense<0.000000e+00> : vector<8xf32>
    %4 = vector.multi_reduction <add>, %1, %cst_3 [1] : vector<8x32xf32> to vector<8xf32>
    %5 = vector.shape_cast %4 : vector<8xf32> to vector<8x1xf32>
    %6 = arith.addf %3, %5 : vector<8x1xf32>
    %cst_4 = arith.constant 1.562500e-02 : f32
    %7 = vector.broadcast %cst_4 : f32 to vector<8x1xf32>
    %8 = arith.mulf %6, %7 : vector<8x1xf32>
    %9 = vector.broadcast %8 : vector<8x1xf32> to vector<8x32xf32>
    %10 = arith.subf %0, %9 : vector<8x32xf32>
    %11 = vector.broadcast %8 : vector<8x1xf32> to vector<8x32xf32>
    %12 = arith.subf %1, %11 : vector<8x32xf32>
    %13 = arith.mulf %10, %10 : vector<8x32xf32>
    %cst_5 = arith.constant dense<0.000000e+00> : vector<8xf32>
    %14 = vector.multi_reduction <add>, %13, %cst_5 [1] : vector<8x32xf32> to vector<8xf32>
    %15 = vector.shape_cast %14 : vector<8xf32> to vector<8x1xf32>
    %16 = arith.mulf %12, %12 : vector<8x32xf32>
    %cst_6 = arith.constant dense<0.000000e+00> : vector<8xf32>
    %17 = vector.multi_reduction <add>, %16, %cst_6 [1] : vector<8x32xf32> to vector<8xf32>
    %18 = vector.shape_cast %17 : vector<8xf32> to vector<8x1xf32>
    %19 = arith.addf %15, %18 : vector<8x1xf32>
    %cst_7 = arith.constant 1.562500e-02 : f32
    %20 = vector.broadcast %cst_7 : f32 to vector<8x1xf32>
    %21 = arith.mulf %19, %20 : vector<8x1xf32>
    %cst_8 = arith.constant 9.99999974E-6 : f32
    %22 = vector.broadcast %cst_8 : f32 to vector<8x1xf32>
    %23 = arith.addf %21, %22 : vector<8x1xf32>
    %24 = math.rsqrt %23 : vector<8x1xf32>
    %c0_9 = arith.constant 0 : index
    %c0_10 = arith.constant 0 : index
    %25 = vector.load %arg5[%c0_9, %c0_10] : memref<4x64xf32, #tpu.memory_space<vmem>>, vector<1x64xf32>
    %c1 = arith.constant 1 : index
    %c0_11 = arith.constant 0 : index
    %26 = vector.load %arg5[%c1, %c0_11] : memref<4x64xf32, #tpu.memory_space<vmem>>, vector<1x64xf32>
    %c2 = arith.constant 2 : index
    %c0_12 = arith.constant 0 : index
    %27 = vector.load %arg5[%c2, %c0_12] : memref<4x64xf32, #tpu.memory_space<vmem>>, vector<1x64xf32>
    %c3 = arith.constant 3 : index
    %c0_13 = arith.constant 0 : index
    %28 = vector.load %arg5[%c3, %c0_13] : memref<4x64xf32, #tpu.memory_space<vmem>>, vector<1x64xf32>
    %29 = vector.broadcast %24 : vector<8x1xf32> to vector<8x32xf32>
    %30 = arith.mulf %10, %29 : vector<8x32xf32>
    %31 = vector.extract_strided_slice %25 {offsets = [0, 0], sizes = [1, 32], strides = [1, 1]} : vector<1x64xf32> to vector<1x32xf32>
    %32 = vector.broadcast %31 : vector<1x32xf32> to vector<8x32xf32>
    %33 = arith.mulf %30, %32 : vector<8x32xf32>
    %34 = vector.extract_strided_slice %26 {offsets = [0, 0], sizes = [1, 32], strides = [1, 1]} : vector<1x64xf32> to vector<1x32xf32>
    %35 = vector.broadcast %34 : vector<1x32xf32> to vector<8x32xf32>
    %36 = arith.addf %33, %35 : vector<8x32xf32>
    %37 = arith.truncf %36 : vector<8x32xf32> to vector<8x32xbf16>
    %38 = vector.broadcast %24 : vector<8x1xf32> to vector<8x32xf32>
    %39 = arith.mulf %12, %38 : vector<8x32xf32>
    %40 = vector.extract_strided_slice %25 {offsets = [0, 32], sizes = [1, 32], strides = [1, 1]} : vector<1x64xf32> to vector<1x32xf32>
    %41 = vector.broadcast %40 : vector<1x32xf32> to vector<8x32xf32>
    %42 = arith.mulf %39, %41 : vector<8x32xf32>
    %43 = vector.extract_strided_slice %26 {offsets = [0, 32], sizes = [1, 32], strides = [1, 1]} : vector<1x64xf32> to vector<1x32xf32>
    %44 = vector.broadcast %43 : vector<1x32xf32> to vector<8x32xf32>
    %45 = arith.addf %42, %44 : vector<8x32xf32>
    %46 = arith.truncf %45 : vector<8x32xf32> to vector<8x32xbf16>
    %c0_14 = arith.constant 0 : index
    %c0_15 = arith.constant 0 : index
    %47 = vector.load %arg3[%c0_14, %c0_15] : memref<32x128xbf16, #tpu.memory_space<vmem>>, vector<32x128xbf16>
    %cst_16 = arith.constant dense<0.000000e+00> : vector<8x128xf32>
    %48 = tpu.matmul %37, %47, %cst_16 {dimension_numbers = #tpu.dot_dimension_numbers<[1], [0], [0], [1], [0, 0, 1, 1], [], []>} : vector<8x32xbf16>, vector<32x128xbf16>, vector<8x128xf32> -> vector<8x128xf32>
    %c0_17 = arith.constant 0 : index
    %c0_18 = arith.constant 0 : index
    %49 = vector.load %arg4[%c0_17, %c0_18] : memref<32x128xbf16, #tpu.memory_space<vmem>>, vector<32x128xbf16>
    %cst_19 = arith.constant dense<0.000000e+00> : vector<8x128xf32>
    %50 = tpu.matmul %46, %49, %cst_19 {dimension_numbers = #tpu.dot_dimension_numbers<[1], [0], [0], [1], [0, 0, 1, 1], [], []>} : vector<8x32xbf16>, vector<32x128xbf16>, vector<8x128xf32> -> vector<8x128xf32>
    %51 = arith.addf %48, %50 : vector<8x128xf32>
    %52 = vector.extract_strided_slice %51 {offsets = [0, 0], sizes = [8, 64], strides = [1, 1]} : vector<8x128xf32> to vector<8x64xf32>
    %53 = vector.extract_strided_slice %51 {offsets = [0, 64], sizes = [8, 64], strides = [1, 1]} : vector<8x128xf32> to vector<8x64xf32>
    %54 = arith.negf %53 : vector<8x64xf32>
    %55 = math.exp %54 : vector<8x64xf32>
    %cst_20 = arith.constant 1.000000e+00 : f32
    %56 = vector.broadcast %cst_20 : f32 to vector<8x64xf32>
    %57 = arith.addf %56, %55 : vector<8x64xf32>
    %58 = arith.divf %56, %57 : vector<8x64xf32>
    %59 = arith.mulf %52, %58 : vector<8x64xf32>
    %cst_21 = arith.constant dense<0.000000e+00> : vector<8xf32>
    %60 = vector.multi_reduction <add>, %59, %cst_21 [1] : vector<8x64xf32> to vector<8xf32>
    %61 = vector.shape_cast %60 : vector<8xf32> to vector<8x1xf32>
    %cst_22 = arith.constant 6.400000e+01 : f32
    %62 = vector.broadcast %cst_22 : f32 to vector<8x1xf32>
    %63 = arith.divf %61, %62 : vector<8x1xf32>
    %64 = vector.broadcast %63 : vector<8x1xf32> to vector<8x64xf32>
    %65 = arith.subf %59, %64 : vector<8x64xf32>
    %66 = arith.mulf %65, %65 : vector<8x64xf32>
    %cst_23 = arith.constant dense<0.000000e+00> : vector<8xf32>
    %67 = vector.multi_reduction <add>, %66, %cst_23 [1] : vector<8x64xf32> to vector<8xf32>
    %68 = vector.shape_cast %67 : vector<8xf32> to vector<8x1xf32>
    %cst_24 = arith.constant 6.400000e+01 : f32
    %69 = vector.broadcast %cst_24 : f32 to vector<8x1xf32>
    %70 = arith.divf %68, %69 : vector<8x1xf32>
    %cst_25 = arith.constant 9.99999974E-6 : f32
    %71 = vector.broadcast %cst_25 : f32 to vector<8x1xf32>
    %72 = arith.addf %70, %71 : vector<8x1xf32>
    %73 = math.rsqrt %72 : vector<8x1xf32>
    %74 = vector.broadcast %73 : vector<8x1xf32> to vector<8x64xf32>
    %75 = arith.mulf %65, %74 : vector<8x64xf32>
    %76 = vector.broadcast %27 : vector<1x64xf32> to vector<8x64xf32>
    %77 = arith.mulf %75, %76 : vector<8x64xf32>
    %78 = vector.broadcast %28 : vector<1x64xf32> to vector<8x64xf32>
    %79 = arith.addf %77, %78 : vector<8x64xf32>
    %c0_26 = arith.constant 0 : index
    %c0_27 = arith.constant 0 : index
    %80 = vector.load %arg6[%c0_26, %c0_27] : memref<8x64xf32, #tpu.memory_space<vmem>>, vector<8x64xf32>
    tpu.vector_store %arg6[%c0_26, %c0_27], %79 {strides = array<i32>} : memref<8x64xf32, #tpu.memory_space<vmem>>, vector<8x64xf32>,
    return
  }
  func.func @transform_0(%arg0: i32) -> (i32, i32) {
    %c0_i32 = arith.constant 0 : i32
    %c0_i32_0 = arith.constant 0 : i32
    return %arg0, %c0_i32 : i32, i32
  }
  func.func @transform_1(%arg0: i32) -> (i32, i32) {
    %c0_i32 = arith.constant 0 : i32
    %c0_i32_0 = arith.constant 0 : i32
    return %arg0, %c0_i32 : i32, i32
  }
  func.func @transform_2(%arg0: i32) -> (i32, i32) {
    %c0_i32 = arith.constant 0 : i32
    %c0_i32_0 = arith.constant 0 : i32
    %c0_i32_1 = arith.constant 0 : i32
    return %c0_i32, %c0_i32_0 : i32, i32
  }
  func.func @transform_3(%arg0: i32) -> (i32, i32) {
    %c0_i32 = arith.constant 0 : i32
    %c0_i32_0 = arith.constant 0 : i32
    %c0_i32_1 = arith.constant 0 : i32
    return %c0_i32, %c0_i32_0 : i32, i32
  }
  func.func @transform_4(%arg0: i32) -> (i32, i32) {
    %c0_i32 = arith.constant 0 : i32
    %c0_i32_0 = arith.constant 0 : i32
    %c0_i32_1 = arith.constant 0 : i32
    return %c0_i32, %c0_i32_0 : i32, i32
  }
  func.func @transform_5(%arg0: i32) -> (i32, i32) {
    %c0_i32 = arith.constant 0 : i32
    %c0_i32_0 = arith.constant 0 : i32
    return %arg0, %c0_i32 : i32, i32
  }
}

</mosaic_0001>

<llo_original>
// kernel: tpu_custom_call.1
$region0: #{tpu_custom_call.1}
  #allocation0 [shape = 'u32[]', space=smem, size = 0x4, offset = 0x4, fixed_abs, tag = 'smem constant byte address 0x4 - core index']
  #allocation1 [shape = 'u32[144,128]{1,0:T(1,128)}', space=vmem, size = 0x12000, scoped, tag = 'internal scratch']
  %s0 = inlined_call_operand.hbm [shape: f32[16,32], index: 0, kind: input, shape index: {}]
  %s1 = inlined_call_operand.hbm [shape: f32[16,32], index: 1, kind: input, shape index: {}]
  %s2 = inlined_call_operand.hbm [shape: bf16[32,128], index: 2, kind: input, shape index: {}]
  %s3 = inlined_call_operand.hbm [shape: bf16[32,128], index: 3, kind: input, shape index: {}]
  %s4 = inlined_call_operand.vmem [shape: f32[4,64], index: 4, kind: input, shape index: {}]
  %s5 = inlined_call_operand.hbm [shape: f32[16,64], index: 5, kind: output, shape index: {}]
  %s6 = sld [smem:[#allocation0]]
  $region69: #{tpu_custom_call.1} parent=0
    _
  %s8 = ssub.s32 1, %s6
  %s9 = scalar_select 0, %s8, %s6
  $region1: #{tpu_custom_call.1} parent=0
    #allocation2 [shape = 'u8[8192]{0}', space=vmem, size = 0x2000, scoped, tag = 'input window, operand 0']
    #allocation3 [shape = 's32[2]{0}', space=sflag, size = 0x8, scoped, tag = 'scoped memory for tpu_custom_call.1']
    #allocation4 [shape = 's32[2]{0}', space=sflag, size = 0x8, scoped, tag = 'scoped memory for tpu_custom_call.1']
    #allocation5 [shape = 'u8[8192]{0}', space=vmem, size = 0x2000, scoped, tag = 'input window, operand 1']
    #allocation6 [shape = 's32[2]{0}', space=sflag, size = 0x8, scoped, tag = 'scoped memory for tpu_custom_call.1']
    #allocation7 [shape = 'u8[8192]{0}', space=vmem, size = 0x2000, scoped, tag = 'input window, operand 2, single buffered']
    #allocation8 [shape = 'u8[8192]{0}', space=vmem, size = 0x2000, scoped, tag = 'input window, operand 3, single buffered']
    #allocation9 [shape = 's32[1]{0}', space=sflag, size = 0x4, scoped, tag = 'scoped memory for tpu_custom_call.1']
    #allocation10 [shape = 'u8[8192]{0}', space=vmem, size = 0x2000, scoped, tag = 'output window, operand 0']
    %10 = vsyncpa [#allocation3], 0
    %s11 = scalar_lea.sflag [#allocation3], 1
    %12 = vsyncpa %s11, 0
    %13 = vsyncpa [#allocation6], 0
    %s14 = scalar_lea.sflag [#allocation6], 1
    %15 = vsyncpa %s14, 0
    %16 = vsyncpa [#allocation9], 0
    %17 = vsyncpa [#allocation4], 0
    %s18 = scalar_lea.sflag [#allocation4], 1
    %19 = vsyncpa %s18, 0
    loop: start=0, step=1, limit=4
    $region2: #{tpu_custom_call.1} parent=1 // loop_pre_header
      _
    $region3: #{tpu_custom_call.1} parent=1 // loop_header
      %s21 = sphi 0, %s25
      %p22 = scmp.ge.s32.totalorder %s21, 4
      %s31 = sphi 0, %s33
      %s34 = sphi 0, %s31
      %s35 = sphi 0, %s34
      %s51 = sphi 0, %s35
      %s57 = sphi 0, %s59
      %s60 = sphi 0, %s57
      %s61 = sphi 0, %s60
      %s77 = sphi 0, %s61
      %s81 = sphi 0, %s81
      %s83 = sphi 0, %s81
      %s84 = sphi 0, %s83
      %s98 = sphi 0, %s84
      %s102 = sphi 0, %s102
      %s104 = sphi 0, %s102
      %s105 = sphi 0, %s104
      %s119 = sphi 0, %s105
      %s123 = sphi 0, %s123
      %s125 = sphi 0, %s123
      %s126 = sphi 0, %s125
      %s140 = sphi 0, %s126
      %s146 = sphi 0, %s148
      %s149 = sphi 0, %s146
      %s150 = sphi 0, %s149
      %s166 = sphi 0, %s150
    $region4: #{tpu_custom_call.1} parent=1 // loop_header_branch
      %24 = sbr.rel (%p22) target = $region8
    $region5: #{tpu_custom_call.1} parent=1 // loop_body
      %s26 = ssub.s32 %s21, 1
      %s27 = ssub.s32 %s21, 2
      %s28 = sadd.s32 %s21, 1
      %s29 = ssub.s32 %s21, %s28
      %p30 = scmp.eq.s32.totalorder %s29, 0
      %s32 = sadd.s32 %s31, 1
      %s33 = scalar_select %p30, %s31, %s32
      %p36 = pneg %p30
      %p37 = scmp.eq.s32.totalorder %s21, 1
      %p38 = por %p36, %p37
      %p39 = scmp.ne.s32.totalorder %s31, %s34
      %p40 = scmp.eq.s32.totalorder %s21, 0
      %p41 = por %p39, %p40
      %p42 = scmp.ne.s32.totalorder %s31, %s34
      %p43 = scmp.eq.s32.totalorder %s26, 1
      %p44 = por %p42, %p43
      %p45 = scmp.ne.s32.totalorder %s34, %s35
      %p46 = scmp.eq.s32.totalorder %s26, 0
      %p47 = por %p45, %p46
      %p48 = scmp.ne.s32.totalorder %s34, %s35
      %p49 = scmp.eq.s32.totalorder %s27, 1
      %p50 = por %p48, %p49
      %p52 = scmp.ne.s32.totalorder %s35, %s51
      %p53 = scmp.eq.s32.totalorder %s27, 0
      %p54 = por %p52, %p53
      %s55 = ssub.s32 %s21, %s28
      %p56 = scmp.eq.s32.totalorder %s55, 0
      %s58 = sadd.s32 %s57, 1
      %s59 = scalar_select %p56, %s57, %s58
      %p62 = pneg %p56
      %p63 = scmp.eq.s32.totalorder %s21, 1
      %p64 = por %p62, %p63
      %p65 = scmp.ne.s32.totalorder %s57, %s60
      %p66 = scmp.eq.s32.totalorder %s21, 0
      %p67 = por %p65, %p66
      %p68 = scmp.ne.s32.totalorder %s57, %s60
      %p69 = scmp.eq.s32.totalorder %s26, 1
      %p70 = por %p68, %p69
      %p71 = scmp.ne.s32.totalorder %s60, %s61
      %p72 = scmp.eq.s32.totalorder %s26, 0
      %p73 = por %p71, %p72
      %p74 = scmp.ne.s32.totalorder %s60, %s61
      %p75 = scmp.eq.s32.totalorder %s27, 1
      %p76 = por %p74, %p75
      %p78 = scmp.ne.s32.totalorder %s61, %s77
      %p79 = scmp.eq.s32.totalorder %s27, 0
      %p80 = por %p78, %p79
      %s82 = sadd.s32 %s81, 1
      %p85 = scmp.eq.s32.totalorder %s21, 1
      %p86 = scmp.ne.s32.totalorder %s81, %s83
      %p87 = scmp.eq.s32.totalorder %s21, 0
      %p88 = por %p86, %p87
      %p89 = scmp.ne.s32.totalorder %s81, %s83
      %p90 = scmp.eq.s32.totalorder %s26, 1
      %p91 = por %p89, %p90
      %p92 = scmp.ne.s32.totalorder %s83, %s84
      %p93 = scmp.eq.s32.totalorder %s26, 0
      %p94 = por %p92, %p93
      %p95 = scmp.ne.s32.totalorder %s83, %s84
      %p96 = scmp.eq.s32.totalorder %s27, 1
      %p97 = por %p95, %p96
      %p99 = scmp.ne.s32.totalorder %s84, %s98
      %p100 = scmp.eq.s32.totalorder %s27, 0
      %p101 = por %p99, %p100
      %s103 = sadd.s32 %s102, 1
      %p106 = scmp.eq.s32.totalorder %s21, 1
      %p107 = scmp.ne.s32.totalorder %s102, %s104
      %p108 = scmp.eq.s32.totalorder %s21, 0
      %p109 = por %p107, %p108
      %p110 = scmp.ne.s32.totalorder %s102, %s104
      %p111 = scmp.eq.s32.totalorder %s26, 1
      %p112 = por %p110, %p111
      %p113 = scmp.ne.s32.totalorder %s104, %s105
      %p114 = scmp.eq.s32.totalorder %s26, 0
      %p115 = por %p113, %p114
      %p116 = scmp.ne.s32.totalorder %s104, %s105
      %p117 = scmp.eq.s32.totalorder %s27, 1
      %p118 = por %p116, %p117
      %p120 = scmp.ne.s32.totalorder %s105, %s119
      %p121 = scmp.eq.s32.totalorder %s27, 0
      %p122 = por %p120, %p121
      %s124 = sadd.s32 %s123, 1
      %p127 = scmp.eq.s32.totalorder %s21, 1
      %p128 = scmp.ne.s32.totalorder %s123, %s125
      %p129 = scmp.eq.s32.totalorder %s21, 0
      %p130 = por %p128, %p129
      %p131 = scmp.ne.s32.totalorder %s123, %s125
      %p132 = scmp.eq.s32.totalorder %s26, 1
      %p133 = por %p131, %p132
      %p134 = scmp.ne.s32.totalorder %s125, %s126
      %p135 = scmp.eq.s32.totalorder %s26, 0
      %p136 = por %p134, %p135
      %p137 = scmp.ne.s32.totalorder %s125, %s126
      %p138 = scmp.eq.s32.totalorder %s27, 1
      %p139 = por %p137, %p138
      %p141 = scmp.ne.s32.totalorder %s126, %s140
      %p142 = scmp.eq.s32.totalorder %s27, 0
      %p143 = por %p141, %p142
      %s144 = ssub.s32 %s21, %s28
      %p145 = scmp.eq.s32.totalorder %s144, 0
      %s147 = sadd.s32 %s146, 1
      %s148 = scalar_select %p145, %s146, %s147
      %p151 = pneg %p145
      %p152 = scmp.eq.s32.totalorder %s21, 1
      %p153 = por %p151, %p152
      %p154 = scmp.ne.s32.totalorder %s146, %s149
      %p155 = scmp.eq.s32.totalorder %s21, 0
      %p156 = por %p154, %p155
      %p157 = scmp.ne.s32.totalorder %s146, %s149
      %p158 = scmp.eq.s32.totalorder %s26, 1
      %p159 = por %p157, %p158
      %p160 = scmp.ne.s32.totalorder %s149, %s150
      %p161 = scmp.eq.s32.totalorder %s26, 0
      %p162 = por %p160, %p161
      %p163 = scmp.ne.s32.totalorder %s149, %s150
      %p164 = scmp.eq.s32.totalorder %s27, 1
      %p165 = por %p163, %p164
      %p167 = scmp.ne.s32.totalorder %s150, %s166
      %p168 = scmp.eq.s32.totalorder %s27, 0
      %p169 = por %p167, %p168
      %p170 = scmp.le.s32.totalorder 1, %s21
      %p171 = scmp.lt.s32.totalorder %s21, 3
      %p172 = pnand %p170, %p171
      %p173 = pneg %p172
      // Predicated region
      $region9: #{tpu_custom_call.1} parent=5 // pred_check
        _
      $region10: #{tpu_custom_call.1} parent=5 // pred_check_branch
        %175 = sbr.rel (%p172) target = $region12
      $region11: #{tpu_custom_call.1} parent=5 // pred_region
        %s176 = ssub.s32 %s21, 1
        // Predicated region
        $region13: #{tpu_custom_call.1} parent=11 // pred_check
          %p177 = pneg %p94
        $region14: #{tpu_custom_call.1} parent=11 // pred_check_branch
          %179 = sbr.rel (%p177) target = $region16
        $region15: #{tpu_custom_call.1} parent=11 // pred_region
          %s181 = ssub.s32 256, 256
          %182 = vsyncadd [#allocation6], %s181
          %s183 = sshll.u32 [#allocation7], 4
          %s184 = int_to_ptr.vmem [resolvable:$true] %s183
          %189 = dma.hbm_to_vmem [thread:$0]  %s2, 256, %s184, [#allocation6], 64, 64, 4
        $region16: #{tpu_custom_call.1} parent=11 // pred_fallthru
          _
        // Predicated region
        $region17: #{tpu_custom_call.1} parent=11 // pred_check
          %p190 = pneg %p115
        $region18: #{tpu_custom_call.1} parent=11 // pred_check_branch
          %192 = sbr.rel (%p190) target = $region20
        $region19: #{tpu_custom_call.1} parent=11 // pred_region
          %s194 = ssub.s32 256, 256
          %195 = vsyncadd [#allocation9], %s194
          %s196 = sshll.u32 [#allocation8], 4
          %s197 = int_to_ptr.vmem [resolvable:$true] %s196
          %202 = dma.hbm_to_vmem [thread:$0]  %s3, 256, %s197, [#allocation9], 64, 64, 4
        $region20: #{tpu_custom_call.1} parent=11 // pred_fallthru
          _
        // Predicated region
        $region21: #{tpu_custom_call.1} parent=11 // pred_check
          %p203 = pneg %p136
        $region22: #{tpu_custom_call.1} parent=11 // pred_check_branch
          %205 = sbr.rel (%p203) target = $region24
        $region23: #{tpu_custom_call.1} parent=11 // pred_region
          _
        $region24: #{tpu_custom_call.1} parent=11 // pred_fallthru
          _
      $region12: #{tpu_custom_call.1} parent=5 // pred_fallthru
        _
      %p206 = scmp.lt.s32.totalorder %s21, 2
      // Predicated region
      $region25: #{tpu_custom_call.1} parent=5 // pred_check
        %p207 = pneg %p206
      $region26: #{tpu_custom_call.1} parent=5 // pred_check_branch
        %209 = sbr.rel (%p207) target = $region28
      $region27: #{tpu_custom_call.1} parent=5 // pred_region
        // Predicated region
        $region29: #{tpu_custom_call.1} parent=27 // pred_check
          %p210 = pneg %p41
        $region30: #{tpu_custom_call.1} parent=27 // pred_check_branch
          %212 = sbr.rel (%p210) target = $region32
        $region31: #{tpu_custom_call.1} parent=27 // pred_region
          %s213 = sand.u32 %s31, 1
          %s214 = scalar_lea.sflag [#allocation3], %s213
          %s215 = sand.u32 %s31, 1
          %s216 = smul.addr %s215, 8
          %s217 = scalar_lea.vmem [#allocation2], %s216
          %s219 = ssub.s32 128, 128
          %220 = vsyncadd %s214, %s219
          %s221 = smul.addr %s21, 128
          %s222 = scalar_lea.hbm %s0, %s221
          %s224 = sshll.u32 %s217, 4
          %s225 = int_to_ptr.vmem [resolvable:$true] %s224
          %227 = dma.hbm_to_vmem [thread:$0]  %s222, 128, %s225, %s214
        $region32: #{tpu_custom_call.1} parent=27 // pred_fallthru
          _
        // Predicated region
        $region33: #{tpu_custom_call.1} parent=27 // pred_check
          %p228 = pneg %p67
        $region34: #{tpu_custom_call.1} parent=27 // pred_check_branch
          %230 = sbr.rel (%p228) target = $region36
        $region35: #{tpu_custom_call.1} parent=27 // pred_region
          %s231 = sand.u32 %s21, 1
          %s232 = scalar_lea.sflag [#allocation6], %s231
          %s233 = sand.u32 %s57, 1
          %s234 = smul.addr %s233, 8
          %s235 = scalar_lea.vmem [#allocation5], %s234
          %s237 = ssub.s32 128, 128
          %238 = vsyncadd %s232, %s237
          %s239 = smul.addr %s21, 128
          %s240 = scalar_lea.hbm %s1, %s239
          %s242 = sshll.u32 %s235, 4
          %s243 = int_to_ptr.vmem [resolvable:$true] %s242
          %245 = dma.hbm_to_vmem [thread:$0]  %s240, 128, %s243, %s232
        $region36: #{tpu_custom_call.1} parent=27 // pred_fallthru
          _
      $region28: #{tpu_custom_call.1} parent=5 // pred_fallthru
        _
      %p246 = scmp.le.s32.totalorder 1, %s21
      %p247 = scmp.lt.s32.totalorder %s21, 3
      %p248 = pnand %p246, %p247
      %p249 = pneg %p248
      // Predicated region
      $region37: #{tpu_custom_call.1} parent=5 // pred_check
        _
      $region38: #{tpu_custom_call.1} parent=5 // pred_check_branch
        %251 = sbr.rel (%p248) target = $region40
      $region39: #{tpu_custom_call.1} parent=5 // pred_region
        %s252 = ssub.s32 %s21, 1
        %s253 = sand.u32 %s34, 1
        %s254 = scalar_lea.sflag [#allocation3], %s253
        %s255 = sand.u32 %s34, 1
        %s256 = smul.addr %s255, 8
        %s257 = scalar_lea.vmem [#allocation2], %s256
        // Predicated region
        $region41: #{tpu_custom_call.1} parent=39 // pred_check
          %p258 = pneg %p47
        $region42: #{tpu_custom_call.1} parent=39 // pred_check_branch
          %260 = sbr.rel (%p258) target = $region44
        $region43: #{tpu_custom_call.1} parent=39 // pred_region
          %261 = dma.done %s254, 128
        $region44: #{tpu_custom_call.1} parent=39 // pred_fallthru
          _
        %s262 = sand.u32 %s26, 1
        %s263 = scalar_lea.sflag [#allocation6], %s262
        %s264 = sand.u32 %s60, 1
        %s265 = smul.addr %s264, 8
        %s266 = scalar_lea.vmem [#allocation5], %s265
        // Predicated region
        $region45: #{tpu_custom_call.1} parent=39 // pred_check
          %p267 = pneg %p73
        $region46: #{tpu_custom_call.1} parent=39 // pred_check_branch
          %269 = sbr.rel (%p267) target = $region48
        $region47: #{tpu_custom_call.1} parent=39 // pred_region
          %270 = dma.done %s263, 128
        $region48: #{tpu_custom_call.1} parent=39 // pred_fallthru
          _
        // Predicated region
        $region49: #{tpu_custom_call.1} parent=39 // pred_check
          %p271 = pneg %p94
        $region50: #{tpu_custom_call.1} parent=39 // pred_check_branch
          %273 = sbr.rel (%p271) target = $region52
        $region51: #{tpu_custom_call.1} parent=39 // pred_region
          %274 = dma.done [#allocation6], 256
        $region52: #{tpu_custom_call.1} parent=39 // pred_fallthru
          _
        // Predicated region
        $region53: #{tpu_custom_call.1} parent=39 // pred_check
          %p275 = pneg %p115
        $region54: #{tpu_custom_call.1} parent=39 // pred_check_branch
          %277 = sbr.rel (%p275) target = $region56
        $region55: #{tpu_custom_call.1} parent=39 // pred_region
          %278 = dma.done [#allocation9], 256
        $region56: #{tpu_custom_call.1} parent=39 // pred_fallthru
          _
        %s279 = sand.u32 %s34, 1
        %s280 = scalar_lea.sflag [#allocation3], %s279
        %s281 = sand.u32 %s34, 1
        %s282 = smul.addr %s281, 8
        %s283 = scalar_lea.vmem [#allocation2], %s282
        %p284 = pneg %p47
        %p285 = pneg %p44
        %s286 = sand.u32 %s26, 1
        %s287 = scalar_lea.sflag [#allocation6], %s286
        %s288 = sand.u32 %s60, 1
        %s289 = smul.addr %s288, 8
        %s290 = scalar_lea.vmem [#allocation5], %s289
        %p291 = pneg %p73
        %p292 = pneg %p70
        %p293 = pneg %p94
        %p294 = pneg %p91
        %p295 = pneg %p115
        %p296 = pneg %p112
        %p297 = pneg %p136
        %p298 = pneg %p133
        %p299 = pneg %p162
        %p300 = pneg %p159
        %s301 = sand.u32 %s149, 1
        %s302 = scalar_lea.sflag [#allocation4], %s301
        %s303 = sand.u32 %s149, 1
        %s304 = smul.addr %s303, 8
        %s305 = scalar_lea.vmem [#allocation10], %s304
        %v307 = vld [vmem:[%s257] sm:$0xff]
        %v308 = vld [vmem:[%s266] sm:$0xff]
        %vm309 = vcmask 261120
        %v310 = vsel %vm309, %v307, 0.0
        %311 = vadd.xlane.f32.xlu0 %v310
        %v312 = vpop.xlane.xlu0 %311
        %v313 = vsel %vm309, %v308, 0.0
        %314 = vadd.xlane.f32.xlu0 %v313
        %v315 = vpop.xlane.xlu0 %314
        %v316 = vadd.f32 %v312, %v315
        %v317 = vmul.f32 %v316, 0.015625
        %v318 = vsub.f32 %v307, %v317
        %v319 = vsub.f32 %v308, %v317
        %v320 = vmul.f32 %v318, %v318
        %v321 = vsel %vm309, %v320, 0.0
        %322 = vadd.xlane.f32.xlu0 %v321
        %v323 = vpop.xlane.xlu0 %322
        %v324 = vmul.f32 %v319, %v319
        %v325 = vsel %vm309, %v324, 0.0
        %326 = vadd.xlane.f32.xlu0 %v325
        %v327 = vpop.xlane.xlu0 %326
        %v328 = vadd.f32 %v323, %v327
        %v329 = vmul.f32 %v328, 0.015625
        %v330 = vadd.f32 %v329, 1e-05
        %v331 = vrsqrt.pop %v330
        %v332 = vld [vmem:[%s4] sm:$0x1]
        %v333 = vld [vmem:[%s4 + $0x1] sm:$0x1]
        %v334 = vld [vmem:[%s4 + $0x2] sm:$0x1]
        %v335 = vld [vmem:[%s4 + $0x3] sm:$0x1]
        %v336 = vmul.f32 %v318, %v331
        %v337 = vlaneseq
        %v338 = vshrl.u32 %v337, 7
        %v339 = vsub.s32 0, %v338
        %v340 = vrot.slane %v332, %v339
        %v341 = vmul.f32 %v336, %v340
        %v342 = vlaneseq
        %v343 = vshrl.u32 %v342, 7
        %v344 = vsub.s32 0, %v343
        %v345 = vrot.slane %v333, %v344
        %v346 = vadd.f32 %v341, %v345
        %v347 = vpack.c.bf16 %v346, %v346
        %v348 = vmul.f32 %v319, %v331
        %350 = vrot.lane.b32.xlu0 %v340, 96
        %v351 = vpop.permute.xlu0 %350
        %v353 = vmul.f32 %v348, %v351
        %355 = vrot.lane.b32.xlu0 %v345, 96
        %v356 = vpop.permute.xlu0 %355
        %v358 = vadd.f32 %v353, %v356
        %v359 = vpack.c.bf16 %v358, %v358
        %v360 = vld [vmem:[#allocation7] sm:$0xf]
        %v361 = vld [vmem:[#allocation7 + $0x4] sm:$0xf]
        %v362 = vld [vmem:[#allocation7 + $0x8] sm:$0xf]
        %v363 = vld [vmem:[#allocation7 + $0xc] sm:$0xf]
        %v364 = vld [vmem:[#allocation8] sm:$0xf]
        %v365 = vld [vmem:[#allocation8 + $0x4] sm:$0xf]
        %v366 = vld [vmem:[#allocation8 + $0x8] sm:$0xf]
        %v367 = vld [vmem:[#allocation8 + $0xc] sm:$0xf]
        %v372 = vunpack.c.l.b16 %v364
        %v373 = vunpack.c.l.b16 %v365
        %v374 = vunpack.c.l.b16 %v366
        %v375 = vunpack.c.l.b16 %v367
        %v376 = vpack.c.b16 %v373, %v372
        %v377 = vpack.c.b16 %v375, %v374
        %v381 = vsel %vm309, %v359, 0
        %383 = vmatprep.subr.bf16.mxu0 0
        %384 = vmatpush1.bf16.msra.mxu0 0
        %385 = vmatprep.subr.bf16.mxu0 0
        %386 = vmatpush1.bf16.msra.mxu0 0
        %387 = vmatprep.subr.bf16.mxu0 0
        %388 = vmatpush1.bf16.msra.mxu0 0
        %389 = vmatprep.subr.bf16.mxu0 0
        %390 = vmatpush1.bf16.msra.mxu0 0
        %391 = vmatprep.subr.bf16.mxu0 0
        %392 = vmatpush1.bf16.msra.mxu0 0
        %393 = vmatprep.subr.bf16.mxu0 0
        %394 = vmatpush1.bf16.msra.mxu0 0
        %395 = vmatprep.subr.bf16.mxu0 0
        %396 = vmatpush1.bf16.msra.mxu0 %v377
        %397 = vmatprep.subr.bf16.mxu0 0
        %398 = vmatpush1.bf16.msra.mxu0 %v376
        %399 = vmatprep.subr.bf16.mxu0 0
        %400 = vmatpush2.bf16.msra.mxu0 0
        %401 = vmatprep.subr.bf16.mxu0 0
        %402 = vmatpush2.bf16.msra.mxu0 0
        %403 = vmatprep.subr.bf16.mxu0 0
        %404 = vmatpush2.bf16.msra.mxu0 0
        %405 = vmatprep.subr.bf16.mxu0 0
        %406 = vmatpush2.bf16.msra.mxu0 0
        %407 = vmatprep.subr.bf16.mxu0 0
        %408 = vmatpush2.bf16.msra.mxu0 0
        %409 = vmatprep.subr.bf16.mxu0 0
        %410 = vmatpush2.bf16.msra.mxu0 0
        %411 = vmatprep.subr.bf16.mxu0 0
        %412 = vmatpush2.bf16.msra.mxu0 0
        %413 = vmatprep.subr.bf16.mxu0 0
        %414 = vmatpush2.bf16.msra.mxu0 0
        %415 = vmatprep.mubr.bf16.mxu0 0
        %416 = vmatmul.mubr.bf16.gmra.mxu0 %v381
        %v417 = vpop.f32.mrf.mxu0
        %v418 = vadd.f32 0.0, %v417
        %v419 = vpop.f32.mrf.mxu0
        %v420 = vpop.f32.mrf.mxu0
        %v421 = vpop.f32.mrf.mxu0
        %422 = vdwg.mxu0
        %v427 = vunpack.c.l.b16 %v360
        %v428 = vunpack.c.l.b16 %v361
        %v429 = vunpack.c.l.b16 %v362
        %v430 = vunpack.c.l.b16 %v363
        %v431 = vpack.c.b16 %v428, %v427
        %v432 = vpack.c.b16 %v430, %v429
        %v436 = vsel %vm309, %v347, 0
        %438 = vmatprep.subr.bf16.mxu0 0
        %439 = vmatpush1.bf16.msra.mxu0 0
        %440 = vmatprep.subr.bf16.mxu0 0
        %441 = vmatpush1.bf16.msra.mxu0 0
        %442 = vmatprep.subr.bf16.mxu0 0
        %443 = vmatpush1.bf16.msra.mxu0 0
        %444 = vmatprep.subr.bf16.mxu0 0
        %445 = vmatpush1.bf16.msra.mxu0 0
        %446 = vmatprep.subr.bf16.mxu0 0
        %447 = vmatpush1.bf16.msra.mxu0 0
        %448 = vmatprep.subr.bf16.mxu0 0
        %449 = vmatpush1.bf16.msra.mxu0 0
        %450 = vmatprep.subr.bf16.mxu0 0
        %451 = vmatpush1.bf16.msra.mxu0 %v432
        %452 = vmatprep.subr.bf16.mxu0 0
        %453 = vmatpush1.bf16.msra.mxu0 %v431
        %454 = vmatprep.subr.bf16.mxu0 0
        %455 = vmatpush2.bf16.msra.mxu0 0
        %456 = vmatprep.subr.bf16.mxu0 0
        %457 = vmatpush2.bf16.msra.mxu0 0
        %458 = vmatprep.subr.bf16.mxu0 0
        %459 = vmatpush2.bf16.msra.mxu0 0
        %460 = vmatprep.subr.bf16.mxu0 0
        %461 = vmatpush2.bf16.msra.mxu0 0
        %462 = vmatprep.subr.bf16.mxu0 0
        %463 = vmatpush2.bf16.msra.mxu0 0
        %464 = vmatprep.subr.bf16.mxu0 0
        %465 = vmatpush2.bf16.msra.mxu0 0
        %466 = vmatprep.subr.bf16.mxu0 0
        %467 = vmatpush2.bf16.msra.mxu0 0
        %468 = vmatprep.subr.bf16.mxu0 0
        %469 = vmatpush2.bf16.msra.mxu0 0
        %470 = vmatprep.mubr.bf16.mxu0 0
        %471 = vmatmul.mubr.bf16.gmra.mxu0 %v436
        %v472 = vpop.f32.mrf.mxu0
        %v473 = vadd.f32 %v418, %v472
        %v474 = vpop.f32.mrf.mxu0
        %v475 = vpop.f32.mrf.mxu0
        %v476 = vpop.f32.mrf.mxu0
        %477 = vdwg.mxu0
        %v478 = vxor.u32 %v473, 2147483648
        %v479 = vmul.f32 %v478, 1.442695
        %v480 = vpow.pop %v479
        %v481 = vadd.f32 %v480, 1.0
        %v482 = vrcp.pop %v481
        %v483 = vmul.f32 1.0, %v482
        %485 = vrot.lane.b32.xlu0 %v483, 64
        %v486 = vpop.permute.xlu0 %485
        %v488 = vmul.f32 %v473, %v486
        %vm489 = vcmask 523264
        %v490 = vsel %vm489, %v488, 0.0
        %491 = vadd.xlane.f32.xlu0 %v490
        %v492 = vpop.xlane.xlu0 %491
        %v493 = vrcp.pop 64.0
        %v494 = vmul.f32 %v492, %v493
        %v495 = vsub.f32 %v488, %v494
        %v496 = vmul.f32 %v495, %v495
        %v497 = vsel %vm489, %v496, 0.0
        %498 = vadd.xlane.f32.xlu0 %v497
        %v499 = vpop.xlane.xlu0 %498
        %v500 = vmul.f32 %v499, %v493
        %v501 = vadd.f32 %v500, 1e-05
        %v502 = vrsqrt.pop %v501
        %v503 = vmul.f32 %v495, %v502
        %v504 = vlaneseq
        %v505 = vshrl.u32 %v504, 7
        %v506 = vsub.s32 0, %v505
        %v507 = vrot.slane %v334, %v506
        %v508 = vmul.f32 %v503, %v507
        %v509 = vlaneseq
        %v510 = vshrl.u32 %v509, 7
        %v511 = vsub.s32 0, %v510
        %v512 = vrot.slane %v335, %v511
        %v513 = vadd.f32 %v508, %v512
        %514 = vst.msk [vmem:[%s305] sm:$0xff] %vm489, %v513
        %s515 = sand.u32 %s149, 1
        %s516 = scalar_lea.sflag [#allocation4], %s515
        %s517 = sand.u32 %s149, 1
        %s518 = smul.addr %s517, 8
        %s519 = scalar_lea.vmem [#allocation10], %s518
        // Predicated region
        $region57: #{tpu_custom_call.1} parent=39 // pred_check
          %p520 = pneg %p159
        $region58: #{tpu_custom_call.1} parent=39 // pred_check_branch
          %522 = sbr.rel (%p520) target = $region60
        $region59: #{tpu_custom_call.1} parent=39 // pred_region
          %s524 = ssub.s32 128, 128
          %525 = vsyncadd %s516, %s524
          %s526 = smul.addr %s26, 128
          %s527 = scalar_lea.hbm %s5, %s526
          %s529 = sshll.u32 %s519, 4
          %s530 = int_to_ptr.vmem [resolvable:$true] %s529
          %532 = dma.vmem_to_hbm [thread:$0]  %s530, 128, %s527, %s516
        $region60: #{tpu_custom_call.1} parent=39 // pred_fallthru
          _
      $region40: #{tpu_custom_call.1} parent=5 // pred_fallthru
        _
      %p533 = scmp.le.s32.totalorder 2, %s21
      // Predicated region
      $region61: #{tpu_custom_call.1} parent=5 // pred_check
        %p534 = pneg %p533
      $region62: #{tpu_custom_call.1} parent=5 // pred_check_branch
        %536 = sbr.rel (%p534) target = $region64
      $region63: #{tpu_custom_call.1} parent=5 // pred_region
        %s537 = ssub.s32 %s21, 2
        // Predicated region
        $region65: #{tpu_custom_call.1} parent=63 // pred_check
          %p538 = pneg %p165
        $region66: #{tpu_custom_call.1} parent=63 // pred_check_branch
          %540 = sbr.rel (%p538) target = $region68
        $region67: #{tpu_custom_call.1} parent=63 // pred_region
          %s541 = sand.u32 %s150, 1
          %s542 = scalar_lea.sflag [#allocation4], %s541
          %s543 = sand.u32 %s150, 1
          %s544 = smul.addr %s543, 8
          %s545 = scalar_lea.vmem [#allocation10], %s544
          %546 = dma.done %s542, 128
        $region68: #{tpu_custom_call.1} parent=63 // pred_fallthru
          _
      $region64: #{tpu_custom_call.1} parent=5 // pred_fallthru
        _
    $region6: #{tpu_custom_call.1} parent=1 // loop_footer
      %s25 = sadd.s32 1, %s21
    $region7: #{tpu_custom_call.1} parent=1 // loop_footer_branch
      %20 = sbr.rel target = $region3
    $region8: #{tpu_custom_call.1} parent=1 // loop_exit
      _
    %547 = vsyncpa [#allocation3], 1
    %s548 = scalar_lea.sflag [#allocation3], 1
    %549 = vsyncpa %s548, 1
    %550 = vsyncpa [#allocation6], 1
    %s551 = scalar_lea.sflag [#allocation6], 1
    %552 = vsyncpa %s551, 1
    %553 = vsyncpa [#allocation9], 1
    %554 = vsyncpa [#allocation4], 1
    %s555 = scalar_lea.sflag [#allocation4], 1
    %556 = vsyncpa %s555, 1

</llo_original>
